<compile_context>
chip_gen: v6e
topology: v6e:2x2x1
jax: 0.10.0
libtpu: 0.0.40
codegen_flags: <defaults>
</compile_context>

<pallas_src>
import jax
import jax.numpy as jnp
from jax.experimental import pallas as pl
from jax.experimental.pallas import tpu as pltpu


def highway_kernel(x_ref, w_ref, b_ref, out_ref):
    """One row-tile of the highway layer.

    x_ref:   (TM, E)   activation tile (streams per grid step)
    w_ref:   (E, 2E)   fused [W_proj | W_gate], VMEM-resident across tiles
    b_ref:   (1, 2E)   fused [b_proj | b_gate], VMEM-resident across tiles
    out_ref: (TM, E)
    """
    x = x_ref[...]                                           # (TM, E) f32
    # Single fused GEMM on the MXU: (TM,E) @ (E,2E) -> (TM,2E), f32 accumulation.
    acc = jnp.dot(x, w_ref[...], preferred_element_type=jnp.float32)
    acc = acc + b_ref[...]                                   # (1, 2E) row broadcast
    e = x.shape[-1]
    proj = jnp.maximum(acc[:, :e], 0.0)                      # relu branch (VPU)
    gate = jax.nn.sigmoid(acc[:, e:])                        # gate branch (EUP)
    # highway combine: x + g*(proj - x)  ==  proj*g + (1-g)*x, one fewer multiply
    out_ref[...] = x + gate * (proj - x)


def _round_up(a, b):
    return (a + b - 1) // b * b


def highway_forward(x_conv_out, w_proj, b_proj, w_gate, b_gate, *, tm=256):
    """x_conv_out: (..., E) (e.g. (B, 1, E)).  Returns same shape.

    Linear weights are stored as (in_size, H_size) so the kernel computes
    x @ W + b (== x @ W_torch.T with W_torch of shape (H, in)).
    """
    orig_shape = x_conv_out.shape
    E = orig_shape[-1]
    x2d = x_conv_out.reshape(-1, E).astype(jnp.float32)
    M = x2d.shape[0]

    # Fuse the two linears into a single (E, 2E) GEMM.
    w_fused = jnp.concatenate([w_proj, w_gate], axis=1).astype(jnp.float32)   # (E, 2E)
    b_fused = jnp.concatenate([b_proj, b_gate], axis=0).reshape(1, 2 * E)
    b_fused = b_fused.astype(jnp.float32)
    # NOTE: for v6e/v7x, casting w_fused (and x2d) to jnp.bfloat16 here roughly
    # halves weight/activation DMA bytes and hits the fast MXU path; the f32
    # accumulator + f32 epilogue above keep numerics close.

    # Row tiling: pad M up to a multiple of the tile so block shapes divide evenly.
    TM = min(tm, _round_up(M, 8))
    M_pad = _round_up(M, TM)
    if M_pad != M:
        x2d = jnp.pad(x2d, ((0, M_pad - M), (0, 0)))
    grid = (M_pad // TM,)

    out2d = pl.pallas_call(
        highway_kernel,
        out_shape=jax.ShapeDtypeStruct((M_pad, E), jnp.float32),
        grid_spec=pl.GridSpec(
            grid=grid,
            in_specs=[
                pl.BlockSpec((TM, E), lambda i: (i, 0)),       # streaming x tiles
                pl.BlockSpec((E, 2 * E), lambda i: (0, 0)),    # weights: fetched once
                pl.BlockSpec((1, 2 * E), lambda i: (0, 0)),    # bias: fetched once
            ],
            out_specs=pl.BlockSpec((TM, E), lambda i: (i, 0)),
        ),
        compiler_params=pltpu.CompilerParams(
            # parallel row axis -> megacore sharding on v7x; harmless on v5e/v6e
            dimension_semantics=("parallel",)),
    )(x2d, w_fused, b_fused)

    if M_pad != M:
        out2d = out2d[:M]
    return out2d.reshape(orig_shape)


def _reference(x_conv_out, w_proj, b_proj, w_gate, b_gate):
    x = x_conv_out
    x_proj = jax.nn.relu(jnp.einsum("...e,eh->...h", x, w_proj) + b_proj)
    x_gate = jax.nn.sigmoid(jnp.einsum("...e,eh->...h", x, w_gate) + b_gate)
    return x_proj * x_gate + (1.0 - x_gate) * x


if __name__ == "__main__":
    batch = 512           # flattened rows -> 2 row tiles of 256 on the parallel axis
    e_word = 128          # in_size == H_size == e_word

    key = jax.random.PRNGKey(0)
    k_x, k_wp, k_bp, k_wg, k_bg = jax.random.split(key, 5)

    x = jax.random.normal(k_x, (batch, 1, e_word), dtype=jnp.float32)
    # deterministic synthetic parameters (shapes implied by nn.Linear(in, H))
    w_proj = jax.random.normal(k_wp, (e_word, e_word), dtype=jnp.float32) * 0.05
    b_proj = jax.random.normal(k_bp, (e_word,), dtype=jnp.float32) * 0.05
    w_gate = jax.random.normal(k_wg, (e_word, e_word), dtype=jnp.float32) * 0.05
    b_gate = jax.random.normal(k_bg, (e_word,), dtype=jnp.float32) * 0.05

    out = highway_forward(x, w_proj, b_proj, w_gate, b_gate)
    out = jax.block_until_ready(out)

    ref = _reference(x, w_proj, b_proj, w_gate, b_gate)
    assert out.shape == (batch, 1, e_word)
    err = float(jnp.max(jnp.abs(out - ref)))
    assert jnp.allclose(out, ref, atol=1e-4, rtol=1e-4), f"max abs err = {err}"

    print("KERNEL_OK")
</pallas_src>

<mosaic_0001>
module attributes {stable_mosaic.version = 11 : i64} {
  func.func @highway_kernel(%arg0: i32, %arg1: memref<256x128xf32, #tpu.memory_space<vmem>>, %arg2: memref<128x256xf32, #tpu.memory_space<vmem>>, %arg3: memref<1x256xf32, #tpu.memory_space<vmem>>, %arg4: memref<256x128xf32, #tpu.memory_space<vmem>>) attributes {dimension_semantics = [#tpu.dimension_semantics<parallel>], iteration_bounds = array<i64: 2>, scalar_prefetch = 0 : i64, scratch_operands = 0 : i64, tpu.core_type = #tpu.core_type<tc>, window_params = [{transform_indices = @transform_0, window_bounds = array<i64: 256, 128>}, {pipeline_mode = #tpu.pipeline_mode<synchronous>, transform_indices = @transform_1, window_bounds = array<i64: 128, 256>}, {pipeline_mode = #tpu.pipeline_mode<synchronous>, transform_indices = @transform_2, window_bounds = array<i64: 1, 256>}, {transform_indices = @transform_3, window_bounds = array<i64: 256, 128>}]} {
    %c0 = arith.constant 0 : index
    %c0_0 = arith.constant 0 : index
    %0 = vector.load %arg1[%c0, %c0_0] : memref<256x128xf32, #tpu.memory_space<vmem>>, vector<256x128xf32>
    %c0_1 = arith.constant 0 : index
    %c0_2 = arith.constant 0 : index
    %1 = vector.load %arg2[%c0_1, %c0_2] : memref<128x256xf32, #tpu.memory_space<vmem>>, vector<128x256xf32>
    %cst = arith.constant dense<0.000000e+00> : vector<256x256xf32>
    %2 = tpu.matmul %0, %1, %cst {dimension_numbers = #tpu.dot_dimension_numbers<[1], [0], [0], [1], [0, 0, 1, 1], [], []>} : vector<256x128xf32>, vector<128x256xf32>, vector<256x256xf32> -> vector<256x256xf32>
    %c0_3 = arith.constant 0 : index
    %c0_4 = arith.constant 0 : index
    %3 = vector.load %arg3[%c0_3, %c0_4] : memref<1x256xf32, #tpu.memory_space<vmem>>, vector<1x256xf32>
    %4 = vector.broadcast %3 : vector<1x256xf32> to vector<256x256xf32>
    %5 = arith.addf %2, %4 : vector<256x256xf32>
    %6 = vector.extract_strided_slice %5 {offsets = [0, 0], sizes = [256, 128], strides = [1, 1]} : vector<256x256xf32> to vector<256x128xf32>
    %cst_5 = arith.constant 0.000000e+00 : f32
    %7 = vector.broadcast %cst_5 : f32 to vector<256x128xf32>
    %8 = arith.maximumf %6, %7 : vector<256x128xf32>
    %9 = vector.extract_strided_slice %5 {offsets = [0, 128], sizes = [256, 128], strides = [1, 1]} : vector<256x256xf32> to vector<256x128xf32>
    %10 = arith.negf %9 : vector<256x128xf32>
    %11 = math.exp %10 : vector<256x128xf32>
    %cst_6 = arith.constant 1.000000e+00 : f32
    %12 = vector.broadcast %cst_6 : f32 to vector<256x128xf32>
    %13 = arith.addf %12, %11 : vector<256x128xf32>
    %14 = arith.divf %12, %13 : vector<256x128xf32>
    %15 = arith.subf %8, %0 : vector<256x128xf32>
    %16 = arith.mulf %14, %15 : vector<256x128xf32>
    %17 = arith.addf %0, %16 : vector<256x128xf32>
    %c0_7 = arith.constant 0 : index
    %c0_8 = arith.constant 0 : index
    %18 = vector.load %arg4[%c0_7, %c0_8] : memref<256x128xf32, #tpu.memory_space<vmem>>, vector<256x128xf32>
    tpu.vector_store %arg4[%c0_7, %c0_8], %17 {strides = array<i32>} : memref<256x128xf32, #tpu.memory_space<vmem>>, vector<256x128xf32>,
    return
  }
  func.func @transform_0(%arg0: i32) -> (i32, i32) {
    %c0_i32 = arith.constant 0 : i32
    %c0_i32_0 = arith.constant 0 : i32
    return %arg0, %c0_i32 : i32, i32
  }
  func.func @transform_1(%arg0: i32) -> (i32, i32) {
    %c0_i32 = arith.constant 0 : i32
    %c0_i32_0 = arith.constant 0 : i32
    %c0_i32_1 = arith.constant 0 : i32
    return %c0_i32, %c0_i32_0 : i32, i32
  }
  func.func @transform_2(%arg0: i32) -> (i32, i32) {
    %c0_i32 = arith.constant 0 : i32
    %c0_i32_0 = arith.constant 0 : i32
    %c0_i32_1 = arith.constant 0 : i32
    return %c0_i32, %c0_i32_0 : i32, i32
  }
  func.func @transform_3(%arg0: i32) -> (i32, i32) {
    %c0_i32 = arith.constant 0 : i32
    %c0_i32_0 = arith.constant 0 : i32
    return %arg0, %c0_i32 : i32, i32
  }
}

</mosaic_0001>

<llo_original>
// kernel: tpu_custom_call.1
$region0: #{tpu_custom_call.1}
  #allocation0 [shape = 'u32[]', space=smem, size = 0x4, offset = 0x4, fixed_abs, tag = 'smem constant byte address 0x4 - core index']
  #allocation1 [shape = 'u32[144,128]{1,0:T(1,128)}', space=vmem, size = 0x12000, scoped, tag = 'internal scratch']
  %s0 = inlined_call_operand.hbm [shape: f32[512,128], index: 0, kind: input, shape index: {}]
  %s1 = inlined_call_operand.hbm [shape: f32[128,256], index: 1, kind: input, shape index: {}]
  %s2 = inlined_call_operand.vmem [shape: f32[1,256], index: 2, kind: input, shape index: {}]
  %s3 = inlined_call_operand.hbm [shape: f32[512,128], index: 3, kind: output, shape index: {}]
  %s4 = sld [smem:[#allocation0]]
  $region53: #{tpu_custom_call.1} parent=0
    _
  %s6 = ssub.s32 1, %s4
  %s7 = scalar_select 0, %s6, %s4
  $region1: #{tpu_custom_call.1} parent=0
    #allocation2 [shape = 'u8[262144]{0}', space=vmem, size = 0x40000, scoped, tag = 'input window, operand 0']
    #allocation3 [shape = 's32[2]{0}', space=sflag, size = 0x8, scoped, tag = 'scoped memory for tpu_custom_call.1']
    #allocation4 [shape = 's32[2]{0}', space=sflag, size = 0x8, scoped, tag = 'scoped memory for tpu_custom_call.1']
    #allocation5 [shape = 'u8[131072]{0}', space=vmem, size = 0x20000, scoped, tag = 'input window, operand 1, single buffered']
    #allocation6 [shape = 's32[1]{0}', space=sflag, size = 0x4, scoped, tag = 'scoped memory for tpu_custom_call.1']
    #allocation7 [shape = 'u8[262144]{0}', space=vmem, size = 0x40000, scoped, tag = 'output window, operand 0']
    %8 = vsyncpa [#allocation3], 0
    %s9 = scalar_lea.sflag [#allocation3], 1
    %10 = vsyncpa %s9, 0
    %11 = vsyncpa [#allocation6], 0
    %12 = vsyncpa [#allocation4], 0
    %s13 = scalar_lea.sflag [#allocation4], 1
    %14 = vsyncpa %s13, 0
    loop: start=0, step=1, limit=4
    $region2: #{tpu_custom_call.1} parent=1 // loop_pre_header
      _
    $region3: #{tpu_custom_call.1} parent=1 // loop_header
      %s16 = sphi 0, %s20
      %p17 = scmp.ge.s32.totalorder %s16, 4
      %s26 = sphi 0, %s28
      %s29 = sphi 0, %s26
      %s30 = sphi 0, %s29
      %s46 = sphi 0, %s30
      %s50 = sphi 0, %s50
      %s52 = sphi 0, %s50
      %s53 = sphi 0, %s52
      %s67 = sphi 0, %s53
      %s71 = sphi 0, %s71
      %s73 = sphi 0, %s71
      %s74 = sphi 0, %s73
      %s88 = sphi 0, %s74
      %s94 = sphi 0, %s96
      %s97 = sphi 0, %s94
      %s98 = sphi 0, %s97
      %s114 = sphi 0, %s98
    $region4: #{tpu_custom_call.1} parent=1 // loop_header_branch
      %19 = sbr.rel (%p17) target = $region8
    $region5: #{tpu_custom_call.1} parent=1 // loop_body
      %s21 = ssub.s32 %s16, 1
      %s22 = ssub.s32 %s16, 2
      %s23 = sadd.s32 %s16, 1
      %s24 = ssub.s32 %s16, %s23
      %p25 = scmp.eq.s32.totalorder %s24, 0
      %s27 = sadd.s32 %s26, 1
      %s28 = scalar_select %p25, %s26, %s27
      %p31 = pneg %p25
      %p32 = scmp.eq.s32.totalorder %s16, 1
      %p33 = por %p31, %p32
      %p34 = scmp.ne.s32.totalorder %s26, %s29
      %p35 = scmp.eq.s32.totalorder %s16, 0
      %p36 = por %p34, %p35
      %p37 = scmp.ne.s32.totalorder %s26, %s29
      %p38 = scmp.eq.s32.totalorder %s21, 1
      %p39 = por %p37, %p38
      %p40 = scmp.ne.s32.totalorder %s29, %s30
      %p41 = scmp.eq.s32.totalorder %s21, 0
      %p42 = por %p40, %p41
      %p43 = scmp.ne.s32.totalorder %s29, %s30
      %p44 = scmp.eq.s32.totalorder %s22, 1
      %p45 = por %p43, %p44
      %p47 = scmp.ne.s32.totalorder %s30, %s46
      %p48 = scmp.eq.s32.totalorder %s22, 0
      %p49 = por %p47, %p48
      %s51 = sadd.s32 %s50, 1
      %p54 = scmp.eq.s32.totalorder %s16, 1
      %p55 = scmp.ne.s32.totalorder %s50, %s52
      %p56 = scmp.eq.s32.totalorder %s16, 0
      %p57 = por %p55, %p56
      %p58 = scmp.ne.s32.totalorder %s50, %s52
      %p59 = scmp.eq.s32.totalorder %s21, 1
      %p60 = por %p58, %p59
      %p61 = scmp.ne.s32.totalorder %s52, %s53
      %p62 = scmp.eq.s32.totalorder %s21, 0
      %p63 = por %p61, %p62
      %p64 = scmp.ne.s32.totalorder %s52, %s53
      %p65 = scmp.eq.s32.totalorder %s22, 1
      %p66 = por %p64, %p65
      %p68 = scmp.ne.s32.totalorder %s53, %s67
      %p69 = scmp.eq.s32.totalorder %s22, 0
      %p70 = por %p68, %p69
      %s72 = sadd.s32 %s71, 1
      %p75 = scmp.eq.s32.totalorder %s16, 1
      %p76 = scmp.ne.s32.totalorder %s71, %s73
      %p77 = scmp.eq.s32.totalorder %s16, 0
      %p78 = por %p76, %p77
      %p79 = scmp.ne.s32.totalorder %s71, %s73
      %p80 = scmp.eq.s32.totalorder %s21, 1
      %p81 = por %p79, %p80
      %p82 = scmp.ne.s32.totalorder %s73, %s74
      %p83 = scmp.eq.s32.totalorder %s21, 0
      %p84 = por %p82, %p83
      %p85 = scmp.ne.s32.totalorder %s73, %s74
      %p86 = scmp.eq.s32.totalorder %s22, 1
      %p87 = por %p85, %p86
      %p89 = scmp.ne.s32.totalorder %s74, %s88
      %p90 = scmp.eq.s32.totalorder %s22, 0
      %p91 = por %p89, %p90
      %s92 = ssub.s32 %s16, %s23
      %p93 = scmp.eq.s32.totalorder %s92, 0
      %s95 = sadd.s32 %s94, 1
      %s96 = scalar_select %p93, %s94, %s95
      %p99 = pneg %p93
      %p100 = scmp.eq.s32.totalorder %s16, 1
      %p101 = por %p99, %p100
      %p102 = scmp.ne.s32.totalorder %s94, %s97
      %p103 = scmp.eq.s32.totalorder %s16, 0
      %p104 = por %p102, %p103
      %p105 = scmp.ne.s32.totalorder %s94, %s97
      %p106 = scmp.eq.s32.totalorder %s21, 1
      %p107 = por %p105, %p106
      %p108 = scmp.ne.s32.totalorder %s97, %s98
      %p109 = scmp.eq.s32.totalorder %s21, 0
      %p110 = por %p108, %p109
      %p111 = scmp.ne.s32.totalorder %s97, %s98
      %p112 = scmp.eq.s32.totalorder %s22, 1
      %p113 = por %p111, %p112
      %p115 = scmp.ne.s32.totalorder %s98, %s114
      %p116 = scmp.eq.s32.totalorder %s22, 0
      %p117 = por %p115, %p116
      %p118 = scmp.le.s32.totalorder 1, %s16
      %p119 = scmp.lt.s32.totalorder %s16, 3
      %p120 = pnand %p118, %p119
      %p121 = pneg %p120
      // Predicated region
      $region9: #{tpu_custom_call.1} parent=5 // pred_check
        _
      $region10: #{tpu_custom_call.1} parent=5 // pred_check_branch
        %123 = sbr.rel (%p120) target = $region12
      $region11: #{tpu_custom_call.1} parent=5 // pred_region
        %s124 = ssub.s32 %s16, 1
        // Predicated region
        $region13: #{tpu_custom_call.1} parent=11 // pred_check
          %p125 = pneg %p63
        $region14: #{tpu_custom_call.1} parent=11 // pred_check_branch
          %127 = sbr.rel (%p125) target = $region16
        $region15: #{tpu_custom_call.1} parent=11 // pred_region
          %s129 = ssub.s32 4096, 4096
          %130 = vsyncadd [#allocation6], %s129
          %s131 = sshll.u32 [#allocation5], 4
          %s132 = int_to_ptr.vmem [resolvable:$true] %s131
          %137 = dma.hbm_to_vmem [thread:$0]  %s1, 4096, %s132, [#allocation6], 256, 256, 16
        $region16: #{tpu_custom_call.1} parent=11 // pred_fallthru
          _
        // Predicated region
        $region17: #{tpu_custom_call.1} parent=11 // pred_check
          %p138 = pneg %p84
        $region18: #{tpu_custom_call.1} parent=11 // pred_check_branch
          %140 = sbr.rel (%p138) target = $region20
        $region19: #{tpu_custom_call.1} parent=11 // pred_region
          _
        $region20: #{tpu_custom_call.1} parent=11 // pred_fallthru
          _
      $region12: #{tpu_custom_call.1} parent=5 // pred_fallthru
        _
      %p141 = scmp.lt.s32.totalorder %s16, 2
      // Predicated region
      $region21: #{tpu_custom_call.1} parent=5 // pred_check
        %p142 = pneg %p141
      $region22: #{tpu_custom_call.1} parent=5 // pred_check_branch
        %144 = sbr.rel (%p142) target = $region24
      $region23: #{tpu_custom_call.1} parent=5 // pred_region
        // Predicated region
        $region25: #{tpu_custom_call.1} parent=23 // pred_check
          %p145 = pneg %p36
        $region26: #{tpu_custom_call.1} parent=23 // pred_check_branch
          %147 = sbr.rel (%p145) target = $region28
        $region27: #{tpu_custom_call.1} parent=23 // pred_region
          %s148 = sand.u32 %s26, 1
          %s149 = scalar_lea.sflag [#allocation3], %s148
          %s150 = sand.u32 %s26, 1
          %s151 = smul.addr %s150, 256
          %s152 = scalar_lea.vmem [#allocation2], %s151
          %s153 = smul.u32 32, %s16
          %s155 = ssub.s32 4096, 4096
          %156 = vsyncadd %s149, %s155
          %s157 = smul.addr %s153, 128
          %s158 = scalar_lea.hbm %s0, %s157
          %s159 = sshll.u32 %s152, 4
          %s160 = int_to_ptr.vmem [resolvable:$true] %s159
          %165 = dma.hbm_to_vmem [thread:$0]  %s158, 4096, %s160, %s149, 128, 128, 8
        $region28: #{tpu_custom_call.1} parent=23 // pred_fallthru
          _
      $region24: #{tpu_custom_call.1} parent=5 // pred_fallthru
        _
      %p166 = scmp.le.s32.totalorder 1, %s16
      %p167 = scmp.lt.s32.totalorder %s16, 3
      %p168 = pnand %p166, %p167
      %p169 = pneg %p168
      // Predicated region
      $region29: #{tpu_custom_call.1} parent=5 // pred_check
        _
      $region30: #{tpu_custom_call.1} parent=5 // pred_check_branch
        %171 = sbr.rel (%p168) target = $region32
      $region31: #{tpu_custom_call.1} parent=5 // pred_region
        %s172 = ssub.s32 %s16, 1
        %s173 = sand.u32 %s29, 1
        %s174 = scalar_lea.sflag [#allocation3], %s173
        %s175 = sand.u32 %s29, 1
        %s176 = smul.addr %s175, 256
        %s177 = scalar_lea.vmem [#allocation2], %s176
        // Predicated region
        $region33: #{tpu_custom_call.1} parent=31 // pred_check
          %p178 = pneg %p42
        $region34: #{tpu_custom_call.1} parent=31 // pred_check_branch
          %180 = sbr.rel (%p178) target = $region36
        $region35: #{tpu_custom_call.1} parent=31 // pred_region
          %181 = dma.done %s174, 4096
        $region36: #{tpu_custom_call.1} parent=31 // pred_fallthru
          _
        // Predicated region
        $region37: #{tpu_custom_call.1} parent=31 // pred_check
          %p182 = pneg %p63
        $region38: #{tpu_custom_call.1} parent=31 // pred_check_branch
          %184 = sbr.rel (%p182) target = $region40
        $region39: #{tpu_custom_call.1} parent=31 // pred_region
          %185 = dma.done [#allocation6], 4096
        $region40: #{tpu_custom_call.1} parent=31 // pred_fallthru
          _
        %s186 = sand.u32 %s29, 1
        %s187 = scalar_lea.sflag [#allocation3], %s186
        %s188 = sand.u32 %s29, 1
        %s189 = smul.addr %s188, 256
        %s190 = scalar_lea.vmem [#allocation2], %s189
        %p191 = pneg %p42
        %p192 = pneg %p39
        %p193 = pneg %p63
        %p194 = pneg %p60
        %p195 = pneg %p84
        %p196 = pneg %p81
        %p197 = pneg %p110
        %p198 = pneg %p107
        %s199 = sand.u32 %s97, 1
        %s200 = scalar_lea.sflag [#allocation4], %s199
        %s201 = sand.u32 %s97, 1
        %s202 = smul.addr %s201, 256
        %s203 = scalar_lea.vmem [#allocation7], %s202
        %s204 = smul.u32 32, %s21
        %s205 = smul.u32 32, %s21
        %v206 = vld [vmem:[%s177] sm:$0xff]
        %v207 = vld [vmem:[%s177 + $0x8] sm:$0xff]
        %v208 = vld [vmem:[%s177 + $0x10] sm:$0xff]
        %v209 = vld [vmem:[%s177 + $0x18] sm:$0xff]
        %v210 = vld [vmem:[%s177 + $0x20] sm:$0xff]
        %v211 = vld [vmem:[%s177 + $0x28] sm:$0xff]
        %v212 = vld [vmem:[%s177 + $0x30] sm:$0xff]
        %v213 = vld [vmem:[%s177 + $0x38] sm:$0xff]
        %v214 = vld [vmem:[%s177 + $0x40] sm:$0xff]
        %v215 = vld [vmem:[%s177 + $0x48] sm:$0xff]
        %v216 = vld [vmem:[%s177 + $0x50] sm:$0xff]
        %v217 = vld [vmem:[%s177 + $0x58] sm:$0xff]
        %v218 = vld [vmem:[%s177 + $0x60] sm:$0xff]
        %v219 = vld [vmem:[%s177 + $0x68] sm:$0xff]
        %v220 = vld [vmem:[%s177 + $0x70] sm:$0xff]
        %v221 = vld [vmem:[%s177 + $0x78] sm:$0xff]
        %v222 = vld [vmem:[%s177 + $0x80] sm:$0xff]
        %v223 = vld [vmem:[%s177 + $0x88] sm:$0xff]
        %v224 = vld [vmem:[%s177 + $0x90] sm:$0xff]
        %v225 = vld [vmem:[%s177 + $0x98] sm:$0xff]
        %v226 = vld [vmem:[%s177 + $0xa0] sm:$0xff]
        %v227 = vld [vmem:[%s177 + $0xa8] sm:$0xff]
        %v228 = vld [vmem:[%s177 + $0xb0] sm:$0xff]
        %v229 = vld [vmem:[%s177 + $0xb8] sm:$0xff]
        %v230 = vld [vmem:[%s177 + $0xc0] sm:$0xff]
        %v231 = vld [vmem:[%s177 + $0xc8] sm:$0xff]
        %v232 = vld [vmem:[%s177 + $0xd0] sm:$0xff]
        %v233 = vld [vmem:[%s177 + $0xd8] sm:$0xff]
        %v234 = vld [vmem:[%s177 + $0xe0] sm:$0xff]
        %v235 = vld [vmem:[%s177 + $0xe8] sm:$0xff]
        %v236 = vld [vmem:[%s177 + $0xf0] sm:$0xff]
        %v237 = vld [vmem:[%s177 + $0xf8] sm:$0xff]
        %v238 = vld [vmem:[#allocation5] sm:$0xff]
        %v239 = vld [vmem:[#allocation5 + $0x8] sm:$0xff]
        %v240 = vld [vmem:[#allocation5 + $0x10] sm:$0xff]
        %v241 = vld [vmem:[#allocation5 + $0x18] sm:$0xff]
        %v242 = vld [vmem:[#allocation5 + $0x20] sm:$0xff]
        %v243 = vld [vmem:[#allocation5 + $0x28] sm:$0xff]
        %v244 = vld [vmem:[#allocation5 + $0x30] sm:$0xff]
        %v245 = vld [vmem:[#allocation5 + $0x38] sm:$0xff]
        %v246 = vld [vmem:[#allocation5 + $0x40] sm:$0xff]
        %v247 = vld [vmem:[#allocation5 + $0x48] sm:$0xff]
        %v248 = vld [vmem:[#allocation5 + $0x50] sm:$0xff]
        %v249 = vld [vmem:[#allocation5 + $0x58] sm:$0xff]
        %v250 = vld [vmem:[#allocation5 + $0x60] sm:$0xff]
        %v251 = vld [vmem:[#allocation5 + $0x68] sm:$0xff]
        %v252 = vld [vmem:[#allocation5 + $0x70] sm:$0xff]
        %v253 = vld [vmem:[#allocation5 + $0x78] sm:$0xff]
        %v254 = vld [vmem:[#allocation5 + $0x80] sm:$0xff]
        %v255 = vld [vmem:[#allocation5 + $0x88] sm:$0xff]
        %v256 = vld [vmem:[#allocation5 + $0x90] sm:$0xff]
        %v257 = vld [vmem:[#allocation5 + $0x98] sm:$0xff]
        %v258 = vld [vmem:[#allocation5 + $0xa0] sm:$0xff]
        %v259 = vld [vmem:[#allocation5 + $0xa8] sm:$0xff]
        %v260 = vld [vmem:[#allocation5 + $0xb0] sm:$0xff]
        %v261 = vld [vmem:[#allocation5 + $0xb8] sm:$0xff]
        %v262 = vld [vmem:[#allocation5 + $0xc0] sm:$0xff]
        %v263 = vld [vmem:[#allocation5 + $0xc8] sm:$0xff]
        %v264 = vld [vmem:[#allocation5 + $0xd0] sm:$0xff]
        %v265 = vld [vmem:[#allocation5 + $0xd8] sm:$0xff]
        %v266 = vld [vmem:[#allocation5 + $0xe0] sm:$0xff]
        %v267 = vld [vmem:[#allocation5 + $0xe8] sm:$0xff]
        %v268 = vld [vmem:[#allocation5 + $0xf0] sm:$0xff]
        %v269 = vld [vmem:[#allocation5 + $0xf8] sm:$0xff]
        %v270 = vld [vmem:[%s2] sm:$0x3]
        %v272 = vlaneseq
        %v273 = vshrl.u32 %v272, 7
        %v274 = vsub.s32 0, %v273
        %v275 = vrot.slane %v270, %v274
        %v276 = vlaneseq
        %v277 = vshrl.u32 %v276, 7
        %v278 = vsub.s32 1, %v277
        %v279 = vrot.slane %v270, %v278
        %282 = vmatprep.subr.mxu0 %v269
        %283 = vmatpush1.msra.mxu0 %v268
        %284 = vmatprep.subr.mxu0 %v267
        %285 = vmatpush1.msra.mxu0 %v266
        %286 = vmatprep.subr.mxu0 %v265
        %287 = vmatpush1.msra.mxu0 %v264
        %288 = vmatprep.subr.mxu0 %v263
        %289 = vmatpush1.msra.mxu0 %v262
        %290 = vmatprep.subr.mxu0 %v261
        %291 = vmatpush1.msra.mxu0 %v260
        %292 = vmatprep.subr.mxu0 %v259
        %293 = vmatpush1.msra.mxu0 %v258
        %294 = vmatprep.subr.mxu0 %v257
        %295 = vmatpush1.msra.mxu0 %v256
        %296 = vmatprep.subr.mxu0 %v255
        %297 = vmatpush1.msra.mxu0 %v254
        %298 = vmatprep.subr.mxu0 %v253
        %299 = vmatpush1.msra.mxu0 %v252
        %300 = vmatprep.subr.mxu0 %v251
        %301 = vmatpush1.msra.mxu0 %v250
        %302 = vmatprep.subr.mxu0 %v249
        %303 = vmatpush1.msra.mxu0 %v248
        %304 = vmatprep.subr.mxu0 %v247
        %305 = vmatpush1.msra.mxu0 %v246
        %306 = vmatprep.subr.mxu0 %v245
        %307 = vmatpush1.msra.mxu0 %v244
        %308 = vmatprep.subr.mxu0 %v243
        %309 = vmatpush1.msra.mxu0 %v242
        %310 = vmatprep.subr.mxu0 %v241
        %311 = vmatpush1.msra.mxu0 %v240
        %312 = vmatprep.subr.mxu0 %v239
        %313 = vmatpush1.msra.mxu0 %v238
        %314 = vmatprep.subr.mxu0 0.0
        %315 = vmatpush2.msra.mxu0 0.0
        %316 = vmatprep.subr.mxu0 0.0
        %317 = vmatpush2.msra.mxu0 0.0
        %318 = vmatprep.subr.mxu0 0.0
        %319 = vmatpush2.msra.mxu0 0.0
        %320 = vmatprep.subr.mxu0 0.0
        %321 = vmatpush2.msra.mxu0 0.0
        %322 = vmatprep.subr.mxu0 0.0
        %323 = vmatpush2.msra.mxu0 0.0
        %324 = vmatprep.subr.mxu0 0.0
        %325 = vmatpush2.msra.mxu0 0.0
        %326 = vmatprep.subr.mxu0 0.0
        %327 = vmatpush2.msra.mxu0 0.0
        %328 = vmatprep.subr.mxu0 0.0
        %329 = vmatpush2.msra.mxu0 0.0
        %330 = vmatprep.subr.mxu0 0.0
        %331 = vmatpush2.msra.mxu0 0.0
        %332 = vmatprep.subr.mxu0 0.0
        %333 = vmatpush2.msra.mxu0 0.0
        %334 = vmatprep.subr.mxu0 0.0
        %335 = vmatpush2.msra.mxu0 0.0
        %336 = vmatprep.subr.mxu0 0.0
        %337 = vmatpush2.msra.mxu0 0.0
        %338 = vmatprep.subr.mxu0 0.0
        %339 = vmatpush2.msra.mxu0 0.0
        %340 = vmatprep.subr.mxu0 0.0
        %341 = vmatpush2.msra.mxu0 0.0
        %342 = vmatprep.subr.mxu0 0.0
        %343 = vmatpush2.msra.mxu0 0.0
        %344 = vmatprep.subr.mxu0 0.0
        %345 = vmatpush2.msra.mxu0 0.0
        %346 = vmatprep.mubr.f32.mxu0 0.0
        %347 = vmatmul.mubr.f32.gmra.mxu0 %v206
        %v348 = vpop.f32.mrf.mxu0
        %v349 = vadd.f32 %v275, %v348
        %v350 = vpop.f32.mrf.mxu0
        %v351 = vadd.f32 %v279, %v350
        %352 = vmatprep.mubr.f32.mxu0 0.0
        %353 = vmatmul.mubr.f32.gmra.mxu0 %v207
        %v354 = vpop.f32.mrf.mxu0
        %v355 = vadd.f32 %v275, %v354
        %v356 = vpop.f32.mrf.mxu0
        %v357 = vadd.f32 %v279, %v356
        %358 = vmatprep.mubr.f32.mxu0 0.0
        %359 = vmatmul.mubr.f32.gmra.mxu0 %v208
        %v360 = vpop.f32.mrf.mxu0
        %v361 = vadd.f32 %v275, %v360
        %v362 = vpop.f32.mrf.mxu0
        %v363 = vadd.f32 %v279, %v362
        %364 = vmatprep.mubr.f32.mxu0 0.0
        %365 = vmatmul.mubr.f32.gmra.mxu0 %v209
        %v366 = vpop.f32.mrf.mxu0
        %v367 = vadd.f32 %v275, %v366
        %v368 = vpop.f32.mrf.mxu0
        %v369 = vadd.f32 %v279, %v368
        %370 = vmatprep.mubr.f32.mxu0 0.0
        %371 = vmatmul.mubr.f32.gmra.mxu0 %v210
        %v372 = vpop.f32.mrf.mxu0
        %v373 = vadd.f32 %v275, %v372
        %v374 = vpop.f32.mrf.mxu0
        %v375 = vadd.f32 %v279, %v374
        %376 = vmatprep.mubr.f32.mxu0 0.0
        %377 = vmatmul.mubr.f32.gmra.mxu0 %v211
        %v378 = vpop.f32.mrf.mxu0
        %v379 = vadd.f32 %v275, %v378
        %v380 = vpop.f32.mrf.mxu0
        %v381 = vadd.f32 %v279, %v380
        %382 = vmatprep.mubr.f32.mxu0 0.0
        %383 = vmatmul.mubr.f32.gmra.mxu0 %v212
        %v384 = vpop.f32.mrf.mxu0
        %v385 = vadd.f32 %v275, %v384
        %v386 = vpop.f32.mrf.mxu0
        %v387 = vadd.f32 %v279, %v386
        %388 = vmatprep.mubr.f32.mxu0 0.0
        %389 = vmatmul.mubr.f32.gmra.mxu0 %v213
        %v390 = vpop.f32.mrf.mxu0
        %v391 = vadd.f32 %v275, %v390
        %v392 = vpop.f32.mrf.mxu0
        %v393 = vadd.f32 %v279, %v392
        %394 = vmatprep.mubr.f32.mxu0 0.0
        %395 = vmatmul.mubr.f32.gmra.mxu0 %v214
        %v396 = vpop.f32.mrf.mxu0
        %v397 = vadd.f32 %v275, %v396
        %v398 = vpop.f32.mrf.mxu0
        %v399 = vadd.f32 %v279, %v398
        %400 = vmatprep.mubr.f32.mxu0 0.0
        %401 = vmatmul.mubr.f32.gmra.mxu0 %v215
        %v402 = vpop.f32.mrf.mxu0
        %v403 = vadd.f32 %v275, %v402
        %v404 = vpop.f32.mrf.mxu0
        %v405 = vadd.f32 %v279, %v404
        %406 = vmatprep.mubr.f32.mxu0 0.0
        %407 = vmatmul.mubr.f32.gmra.mxu0 %v216
        %v408 = vpop.f32.mrf.mxu0
        %v409 = vadd.f32 %v275, %v408
        %v410 = vpop.f32.mrf.mxu0
        %v411 = vadd.f32 %v279, %v410
        %412 = vmatprep.mubr.f32.mxu0 0.0
        %413 = vmatmul.mubr.f32.gmra.mxu0 %v217
        %v414 = vpop.f32.mrf.mxu0
        %v415 = vadd.f32 %v275, %v414
        %v416 = vpop.f32.mrf.mxu0
        %v417 = vadd.f32 %v279, %v416
        %418 = vmatprep.mubr.f32.mxu0 0.0
        %419 = vmatmul.mubr.f32.gmra.mxu0 %v218
        %v420 = vpop.f32.mrf.mxu0
        %v421 = vadd.f32 %v275, %v420
        %v422 = vpop.f32.mrf.mxu0
        %v423 = vadd.f32 %v279, %v422
        %424 = vmatprep.mubr.f32.mxu0 0.0
        %425 = vmatmul.mubr.f32.gmra.mxu0 %v219
        %v426 = vpop.f32.mrf.mxu0
        %v427 = vadd.f32 %v275, %v426
        %v428 = vpop.f32.mrf.mxu0
        %v429 = vadd.f32 %v279, %v428
        %430 = vmatprep.mubr.f32.mxu0 0.0
        %431 = vmatmul.mubr.f32.gmra.mxu0 %v220
        %v432 = vpop.f32.mrf.mxu0
        %v433 = vadd.f32 %v275, %v432
        %v434 = vpop.f32.mrf.mxu0
        %v435 = vadd.f32 %v279, %v434
        %436 = vmatprep.mubr.f32.mxu0 0.0
        %437 = vmatmul.mubr.f32.gmra.mxu0 %v221
        %v438 = vpop.f32.mrf.mxu0
        %v439 = vadd.f32 %v275, %v438
        %v440 = vpop.f32.mrf.mxu0
        %v441 = vadd.f32 %v279, %v440
        %442 = vmatprep.mubr.f32.mxu0 0.0
        %443 = vmatmul.mubr.f32.gmra.mxu0 %v222
        %v444 = vpop.f32.mrf.mxu0
        %v445 = vadd.f32 %v275, %v444
        %v446 = vpop.f32.mrf.mxu0
        %v447 = vadd.f32 %v279, %v446
        %448 = vmatprep.mubr.f32.mxu0 0.0
        %449 = vmatmul.mubr.f32.gmra.mxu0 %v223
        %v450 = vpop.f32.mrf.mxu0
        %v451 = vadd.f32 %v275, %v450
        %v452 = vpop.f32.mrf.mxu0
        %v453 = vadd.f32 %v279, %v452
        %454 = vmatprep.mubr.f32.mxu0 0.0
        %455 = vmatmul.mubr.f32.gmra.mxu0 %v224
        %v456 = vpop.f32.mrf.mxu0
        %v457 = vadd.f32 %v275, %v456
        %v458 = vpop.f32.mrf.mxu0
        %v459 = vadd.f32 %v279, %v458
        %460 = vmatprep.mubr.f32.mxu0 0.0
        %461 = vmatmul.mubr.f32.gmra.mxu0 %v225
        %v462 = vpop.f32.mrf.mxu0
        %v463 = vadd.f32 %v275, %v462
        %v464 = vpop.f32.mrf.mxu0
        %v465 = vadd.f32 %v279, %v464
        %466 = vmatprep.mubr.f32.mxu0 0.0
        %467 = vmatmul.mubr.f32.gmra.mxu0 %v226
        %v468 = vpop.f32.mrf.mxu0
        %v469 = vadd.f32 %v275, %v468
        %v470 = vpop.f32.mrf.mxu0
        %v471 = vadd.f32 %v279, %v470
        %472 = vmatprep.mubr.f32.mxu0 0.0
        %473 = vmatmul.mubr.f32.gmra.mxu0 %v227
        %v474 = vpop.f32.mrf.mxu0
        %v475 = vadd.f32 %v275, %v474
        %v476 = vpop.f32.mrf.mxu0
        %v477 = vadd.f32 %v279, %v476
        %478 = vmatprep.mubr.f32.mxu0 0.0
        %479 = vmatmul.mubr.f32.gmra.mxu0 %v228
        %v480 = vpop.f32.mrf.mxu0
        %v481 = vadd.f32 %v275, %v480
        %v482 = vpop.f32.mrf.mxu0
        %v483 = vadd.f32 %v279, %v482
        %484 = vmatprep.mubr.f32.mxu0 0.0
        %485 = vmatmul.mubr.f32.gmra.mxu0 %v229
        %v486 = vpop.f32.mrf.mxu0
        %v487 = vadd.f32 %v275, %v486
        %v488 = vpop.f32.mrf.mxu0
        %v489 = vadd.f32 %v279, %v488
        %490 = vmatprep.mubr.f32.mxu0 0.0
        %491 = vmatmul.mubr.f32.gmra.mxu0 %v230
        %v492 = vpop.f32.mrf.mxu0
        %v493 = vadd.f32 %v275, %v492
        %v494 = vpop.f32.mrf.mxu0
        %v495 = vadd.f32 %v279, %v494
        %496 = vmatprep.mubr.f32.mxu0 0.0
        %497 = vmatmul.mubr.f32.gmra.mxu0 %v231
        %v498 = vpop.f32.mrf.mxu0
        %v499 = vadd.f32 %v275, %v498
        %v500 = vpop.f32.mrf.mxu0
        %v501 = vadd.f32 %v279, %v500
        %502 = vmatprep.mubr.f32.mxu0 0.0
        %503 = vmatmul.mubr.f32.gmra.mxu0 %v232
        %v504 = vpop.f32.mrf.mxu0
        %v505 = vadd.f32 %v275, %v504
        %v506 = vpop.f32.mrf.mxu0
        %v507 = vadd.f32 %v279, %v506
        %508 = vmatprep.mubr.f32.mxu0 0.0
        %509 = vmatmul.mubr.f32.gmra.mxu0 %v233
        %v510 = vpop.f32.mrf.mxu0
        %v511 = vadd.f32 %v275, %v510
        %v512 = vpop.f32.mrf.mxu0
        %v513 = vadd.f32 %v279, %v512
        %514 = vmatprep.mubr.f32.mxu0 0.0
        %515 = vmatmul.mubr.f32.gmra.mxu0 %v234
        %v516 = vpop.f32.mrf.mxu0
        %v517 = vadd.f32 %v275, %v516
        %v518 = vpop.f32.mrf.mxu0
        %v519 = vadd.f32 %v279, %v518
        %520 = vmatprep.mubr.f32.mxu0 0.0
        %521 = vmatmul.mubr.f32.gmra.mxu0 %v235
        %v522 = vpop.f32.mrf.mxu0
        %v523 = vadd.f32 %v275, %v522
        %v524 = vpop.f32.mrf.mxu0
        %v525 = vadd.f32 %v279, %v524
        %526 = vmatprep.mubr.f32.mxu0 0.0
        %527 = vmatmul.mubr.f32.gmra.mxu0 %v236
        %v528 = vpop.f32.mrf.mxu0
        %v529 = vadd.f32 %v275, %v528
        %v530 = vpop.f32.mrf.mxu0
        %v531 = vadd.f32 %v279, %v530
        %532 = vmatprep.mubr.f32.mxu0 0.0
        %533 = vmatmul.mubr.f32.gmra.mxu0 %v237
        %v534 = vpop.f32.mrf.mxu0
        %v535 = vadd.f32 %v275, %v534
        %v536 = vpop.f32.mrf.mxu0
        %v537 = vadd.f32 %v279, %v536
        %538 = vdwg.mxu0
        %v539 = vmax.f32 %v349, 0.0
        %v540 = vmax.f32 %v355, 0.0
        %v541 = vmax.f32 %v361, 0.0
        %v542 = vmax.f32 %v367, 0.0
        %v543 = vmax.f32 %v373, 0.0
        %v544 = vmax.f32 %v379, 0.0
        %v545 = vmax.f32 %v385, 0.0
        %v546 = vmax.f32 %v391, 0.0
        %v547 = vmax.f32 %v397, 0.0
        %v548 = vmax.f32 %v403, 0.0
        %v549 = vmax.f32 %v409, 0.0
        %v550 = vmax.f32 %v415, 0.0
        %v551 = vmax.f32 %v421, 0.0
        %v552 = vmax.f32 %v427, 0.0
        %v553 = vmax.f32 %v433, 0.0
        %v554 = vmax.f32 %v439, 0.0
        %v555 = vmax.f32 %v445, 0.0
        %v556 = vmax.f32 %v451, 0.0
        %v557 = vmax.f32 %v457, 0.0
        %v558 = vmax.f32 %v463, 0.0
        %v559 = vmax.f32 %v469, 0.0
        %v560 = vmax.f32 %v475, 0.0
        %v561 = vmax.f32 %v481, 0.0
        %v562 = vmax.f32 %v487, 0.0
        %v563 = vmax.f32 %v493, 0.0
        %v564 = vmax.f32 %v499, 0.0
        %v565 = vmax.f32 %v505, 0.0
        %v566 = vmax.f32 %v511, 0.0
        %v567 = vmax.f32 %v517, 0.0
        %v568 = vmax.f32 %v523, 0.0
        %v569 = vmax.f32 %v529, 0.0
        %v570 = vmax.f32 %v535, 0.0
        %v571 = vxor.u32 %v351, 2147483648
        %v572 = vxor.u32 %v357, 2147483648
        %v573 = vxor.u32 %v363, 2147483648
        %v574 = vxor.u32 %v369, 2147483648
        %v575 = vxor.u32 %v375, 2147483648
        %v576 = vxor.u32 %v381, 2147483648
        %v577 = vxor.u32 %v387, 2147483648
        %v578 = vxor.u32 %v393, 2147483648
        %v579 = vxor.u32 %v399, 2147483648
        %v580 = vxor.u32 %v405, 2147483648
        %v581 = vxor.u32 %v411, 2147483648
        %v582 = vxor.u32 %v417, 2147483648
        %v583 = vxor.u32 %v423, 2147483648
        %v584 = vxor.u32 %v429, 2147483648
        %v585 = vxor.u32 %v435, 2147483648
        %v586 = vxor.u32 %v441, 2147483648
        %v587 = vxor.u32 %v447, 2147483648
        %v588 = vxor.u32 %v453, 2147483648
        %v589 = vxor.u32 %v459, 2147483648
        %v590 = vxor.u32 %v465, 2147483648
        %v591 = vxor.u32 %v471, 2147483648
        %v592 = vxor.u32 %v477, 2147483648
        %v593 = vxor.u32 %v483, 2147483648
        %v594 = vxor.u32 %v489, 2147483648
        %v595 = vxor.u32 %v495, 2147483648
        %v596 = vxor.u32 %v501, 2147483648
        %v597 = vxor.u32 %v507, 2147483648
        %v598 = vxor.u32 %v513, 2147483648
        %v599 = vxor.u32 %v519, 2147483648
        %v600 = vxor.u32 %v525, 2147483648
        %v601 = vxor.u32 %v531, 2147483648
        %v602 = vxor.u32 %v537, 2147483648
        %v603 = vmul.f32 %v571, 1.442695
        %v604 = vpow.pop %v603
        %v605 = vmul.f32 %v572, 1.442695
        %v606 = vpow.pop %v605
        %v607 = vmul.f32 %v573, 1.442695
        %v608 = vpow.pop %v607
        %v609 = vmul.f32 %v574, 1.442695
        %v610 = vpow.pop %v609
        %v611 = vmul.f32 %v575, 1.442695
        %v612 = vpow.pop %v611
        %v613 = vmul.f32 %v576, 1.442695
        %v614 = vpow.pop %v613
        %v615 = vmul.f32 %v577, 1.442695
        %v616 = vpow.pop %v615
        %v617 = vmul.f32 %v578, 1.442695
        %v618 = vpow.pop %v617
        %v619 = vmul.f32 %v579, 1.442695
        %v620 = vpow.pop %v619
        %v621 = vmul.f32 %v580, 1.442695
        %v622 = vpow.pop %v621
        %v623 = vmul.f32 %v581, 1.442695
        %v624 = vpow.pop %v623
        %v625 = vmul.f32 %v582, 1.442695
        %v626 = vpow.pop %v625
        %v627 = vmul.f32 %v583, 1.442695
        %v628 = vpow.pop %v627
        %v629 = vmul.f32 %v584, 1.442695
        %v630 = vpow.pop %v629
        %v631 = vmul.f32 %v585, 1.442695
        %v632 = vpow.pop %v631
        %v633 = vmul.f32 %v586, 1.442695
        %v634 = vpow.pop %v633
        %v635 = vmul.f32 %v587, 1.442695
        %v636 = vpow.pop %v635
        %v637 = vmul.f32 %v588, 1.442695
        %v638 = vpow.pop %v637
        %v639 = vmul.f32 %v589, 1.442695
        %v640 = vpow.pop %v639
        %v641 = vmul.f32 %v590, 1.442695
        %v642 = vpow.pop %v641
        %v643 = vmul.f32 %v591, 1.442695
        %v644 = vpow.pop %v643
        %v645 = vmul.f32 %v592, 1.442695
        %v646 = vpow.pop %v645
        %v647 = vmul.f32 %v593, 1.442695
        %v648 = vpow.pop %v647
        %v649 = vmul.f32 %v594, 1.442695
        %v650 = vpow.pop %v649
        %v651 = vmul.f32 %v595, 1.442695
        %v652 = vpow.pop %v651
        %v653 = vmul.f32 %v596, 1.442695
        %v654 = vpow.pop %v653
        %v655 = vmul.f32 %v597, 1.442695
        %v656 = vpow.pop %v655
        %v657 = vmul.f32 %v598, 1.442695
        %v658 = vpow.pop %v657
        %v659 = vmul.f32 %v599, 1.442695
        %v660 = vpow.pop %v659
        %v661 = vmul.f32 %v600, 1.442695
        %v662 = vpow.pop %v661
        %v663 = vmul.f32 %v601, 1.442695
        %v664 = vpow.pop %v663
        %v665 = vmul.f32 %v602, 1.442695
        %v666 = vpow.pop %v665
        %v667 = vadd.f32 %v604, 1.0
        %v668 = vadd.f32 %v606, 1.0
        %v669 = vadd.f32 %v608, 1.0
        %v670 = vadd.f32 %v610, 1.0
        %v671 = vadd.f32 %v612, 1.0
        %v672 = vadd.f32 %v614, 1.0
        %v673 = vadd.f32 %v616, 1.0
        %v674 = vadd.f32 %v618, 1.0
        %v675 = vadd.f32 %v620, 1.0
        %v676 = vadd.f32 %v622, 1.0
        %v677 = vadd.f32 %v624, 1.0
        %v678 = vadd.f32 %v626, 1.0
        %v679 = vadd.f32 %v628, 1.0
        %v680 = vadd.f32 %v630, 1.0
        %v681 = vadd.f32 %v632, 1.0
        %v682 = vadd.f32 %v634, 1.0
        %v683 = vadd.f32 %v636, 1.0
        %v684 = vadd.f32 %v638, 1.0
        %v685 = vadd.f32 %v640, 1.0
        %v686 = vadd.f32 %v642, 1.0
        %v687 = vadd.f32 %v644, 1.0
        %v688 = vadd.f32 %v646, 1.0
        %v689 = vadd.f32 %v648, 1.0
        %v690 = vadd.f32 %v650, 1.0
        %v691 = vadd.f32 %v652, 1.0
        %v692 = vadd.f32 %v654, 1.0
        %v693 = vadd.f32 %v656, 1.0
        %v694 = vadd.f32 %v658, 1.0
        %v695 = vadd.f32 %v660, 1.0
        %v696 = vadd.f32 %v662, 1.0
        %v697 = vadd.f32 %v664, 1.0
        %v698 = vadd.f32 %v666, 1.0
        %v699 = vrcp.pop %v667
        %v700 = vmul.f32 1.0, %v699
        %v701 = vrcp.pop %v668
        %v702 = vmul.f32 1.0, %v701
        %v703 = vrcp.pop %v669
        %v704 = vmul.f32 1.0, %v703
        %v705 = vrcp.pop %v670
        %v706 = vmul.f32 1.0, %v705
        %v707 = vrcp.pop %v671
        %v708 = vmul.f32 1.0, %v707
        %v709 = vrcp.pop %v672
        %v710 = vmul.f32 1.0, %v709
        %v711 = vrcp.pop %v673
        %v712 = vmul.f32 1.0, %v711
        %v713 = vrcp.pop %v674
        %v714 = vmul.f32 1.0, %v713
        %v715 = vrcp.pop %v675
        %v716 = vmul.f32 1.0, %v715
        %v717 = vrcp.pop %v676
        %v718 = vmul.f32 1.0, %v717
        %v719 = vrcp.pop %v677
        %v720 = vmul.f32 1.0, %v719
        %v721 = vrcp.pop %v678
        %v722 = vmul.f32 1.0, %v721
        %v723 = vrcp.pop %v679
        %v724 = vmul.f32 1.0, %v723
        %v725 = vrcp.pop %v680
        %v726 = vmul.f32 1.0, %v725
        %v727 = vrcp.pop %v681
        %v728 = vmul.f32 1.0, %v727
        %v729 = vrcp.pop %v682
        %v730 = vmul.f32 1.0, %v729
        %v731 = vrcp.pop %v683
        %v732 = vmul.f32 1.0, %v731
        %v733 = vrcp.pop %v684
        %v734 = vmul.f32 1.0, %v733
        %v735 = vrcp.pop %v685
        %v736 = vmul.f32 1.0, %v735
        %v737 = vrcp.pop %v686
        %v738 = vmul.f32 1.0, %v737
        %v739 = vrcp.pop %v687
        %v740 = vmul.f32 1.0, %v739
        %v741 = vrcp.pop %v688
        %v742 = vmul.f32 1.0, %v741
        %v743 = vrcp.pop %v689
        %v744 = vmul.f32 1.0, %v743
        %v745 = vrcp.pop %v690
        %v746 = vmul.f32 1.0, %v745
        %v747 = vrcp.pop %v691
        %v748 = vmul.f32 1.0, %v747
        %v749 = vrcp.pop %v692
        %v750 = vmul.f32 1.0, %v749
        %v751 = vrcp.pop %v693
        %v752 = vmul.f32 1.0, %v751
        %v753 = vrcp.pop %v694
        %v754 = vmul.f32 1.0, %v753
        %v755 = vrcp.pop %v695
        %v756 = vmul.f32 1.0, %v755
        %v757 = vrcp.pop %v696
        %v758 = vmul.f32 1.0, %v757
        %v759 = vrcp.pop %v697
        %v760 = vmul.f32 1.0, %v759
        %v761 = vrcp.pop %v698
        %v762 = vmul.f32 1.0, %v761
        %v763 = vsub.f32 %v539, %v206
        %v764 = vsub.f32 %v540, %v207
        %v765 = vsub.f32 %v541, %v208
        %v766 = vsub.f32 %v542, %v209
        %v767 = vsub.f32 %v543, %v210
        %v768 = vsub.f32 %v544, %v211
        %v769 = vsub.f32 %v545, %v212
        %v770 = vsub.f32 %v546, %v213
        %v771 = vsub.f32 %v547, %v214
        %v772 = vsub.f32 %v548, %v215
        %v773 = vsub.f32 %v549, %v216
        %v774 = vsub.f32 %v550, %v217
        %v775 = vsub.f32 %v551, %v218
        %v776 = vsub.f32 %v552, %v219
        %v777 = vsub.f32 %v553, %v220
        %v778 = vsub.f32 %v554, %v221
        %v779 = vsub.f32 %v555, %v222
        %v780 = vsub.f32 %v556, %v223
        %v781 = vsub.f32 %v557, %v224
        %v782 = vsub.f32 %v558, %v225
        %v783 = vsub.f32 %v559, %v226
        %v784 = vsub.f32 %v560, %v227
        %v785 = vsub.f32 %v561, %v228
        %v786 = vsub.f32 %v562, %v229
        %v787 = vsub.f32 %v563, %v230
        %v788 = vsub.f32 %v564, %v231
        %v789 = vsub.f32 %v565, %v232
        %v790 = vsub.f32 %v566, %v233
        %v791 = vsub.f32 %v567, %v234
        %v792 = vsub.f32 %v568, %v235
        %v793 = vsub.f32 %v569, %v236
        %v794 = vsub.f32 %v570, %v237
        %v795 = vmul.f32 %v700, %v763
        %v796 = vmul.f32 %v702, %v764
        %v797 = vmul.f32 %v704, %v765
        %v798 = vmul.f32 %v706, %v766
        %v799 = vmul.f32 %v708, %v767
        %v800 = vmul.f32 %v710, %v768
        %v801 = vmul.f32 %v712, %v769
        %v802 = vmul.f32 %v714, %v770
        %v803 = vmul.f32 %v716, %v771
        %v804 = vmul.f32 %v718, %v772
        %v805 = vmul.f32 %v720, %v773
        %v806 = vmul.f32 %v722, %v774
        %v807 = vmul.f32 %v724, %v775
        %v808 = vmul.f32 %v726, %v776
        %v809 = vmul.f32 %v728, %v777
        %v810 = vmul.f32 %v730, %v778
        %v811 = vmul.f32 %v732, %v779
        %v812 = vmul.f32 %v734, %v780
        %v813 = vmul.f32 %v736, %v781
        %v814 = vmul.f32 %v738, %v782
        %v815 = vmul.f32 %v740, %v783
        %v816 = vmul.f32 %v742, %v784
        %v817 = vmul.f32 %v744, %v785
        %v818 = vmul.f32 %v746, %v786
        %v819 = vmul.f32 %v748, %v787
        %v820 = vmul.f32 %v750, %v788
        %v821 = vmul.f32 %v752, %v789
        %v822 = vmul.f32 %v754, %v790
        %v823 = vmul.f32 %v756, %v791
        %v824 = vmul.f32 %v758, %v792
        %v825 = vmul.f32 %v760, %v793
        %v826 = vmul.f32 %v762, %v794
        %v827 = vadd.f32 %v206, %v795
        %v828 = vadd.f32 %v207, %v796
        %v829 = vadd.f32 %v208, %v797
        %v830 = vadd.f32 %v209, %v798
        %v831 = vadd.f32 %v210, %v799
        %v832 = vadd.f32 %v211, %v800
        %v833 = vadd.f32 %v212, %v801
        %v834 = vadd.f32 %v213, %v802
        %v835 = vadd.f32 %v214, %v803
        %v836 = vadd.f32 %v215, %v804
        %v837 = vadd.f32 %v216, %v805
        %v838 = vadd.f32 %v217, %v806
        %v839 = vadd.f32 %v218, %v807
        %v840 = vadd.f32 %v219, %v808
        %v841 = vadd.f32 %v220, %v809
        %v842 = vadd.f32 %v221, %v810
        %v843 = vadd.f32 %v222, %v811
        %v844 = vadd.f32 %v223, %v812
        %v845 = vadd.f32 %v224, %v813
        %v846 = vadd.f32 %v225, %v814
        %v847 = vadd.f32 %v226, %v815
        %v848 = vadd.f32 %v227, %v816
        %v849 = vadd.f32 %v228, %v817
        %v850 = vadd.f32 %v229, %v818
        %v851 = vadd.f32 %v230, %v819
        %v852 = vadd.f32 %v231, %v820
        %v853 = vadd.f32 %v232, %v821
        %v854 = vadd.f32 %v233, %v822
        %v855 = vadd.f32 %v234, %v823
        %v856 = vadd.f32 %v235, %v824
        %v857 = vadd.f32 %v236, %v825
        %v858 = vadd.f32 %v237, %v826
        %859 = vst [vmem:[%s203] sm:$0xff] %v827
        %860 = vst [vmem:[%s203 + $0x8] sm:$0xff] %v828
        %861 = vst [vmem:[%s203 + $0x10] sm:$0xff] %v829
        %862 = vst [vmem:[%s203 + $0x18] sm:$0xff] %v830
        %863 = vst [vmem:[%s203 + $0x20] sm:$0xff] %v831
        %864 = vst [vmem:[%s203 + $0x28] sm:$0xff] %v832
        %865 = vst [vmem:[%s203 + $0x30] sm:$0xff] %v833
        %866 = vst [vmem:[%s203 + $0x38] sm:$0xff] %v834
        %867 = vst [vmem:[%s203 + $0x40] sm:$0xff] %v835
        %868 = vst [vmem:[%s203 + $0x48] sm:$0xff] %v836
        %869 = vst [vmem:[%s203 + $0x50] sm:$0xff] %v837
        %870 = vst [vmem:[%s203 + $0x58] sm:$0xff] %v838
        %871 = vst [vmem:[%s203 + $0x60] sm:$0xff] %v839
        %872 = vst [vmem:[%s203 + $0x68] sm:$0xff] %v840
        %873 = vst [vmem:[%s203 + $0x70] sm:$0xff] %v841
        %874 = vst [vmem:[%s203 + $0x78] sm:$0xff] %v842
        %875 = vst [vmem:[%s203 + $0x80] sm:$0xff] %v843
        %876 = vst [vmem:[%s203 + $0x88] sm:$0xff] %v844
        %877 = vst [vmem:[%s203 + $0x90] sm:$0xff] %v845
        %878 = vst [vmem:[%s203 + $0x98] sm:$0xff] %v846
        %879 = vst [vmem:[%s203 + $0xa0] sm:$0xff] %v847
        %880 = vst [vmem:[%s203 + $0xa8] sm:$0xff] %v848
        %881 = vst [vmem:[%s203 + $0xb0] sm:$0xff] %v849
        %882 = vst [vmem:[%s203 + $0xb8] sm:$0xff] %v850
        %883 = vst [vmem:[%s203 + $0xc0] sm:$0xff] %v851
        %884 = vst [vmem:[%s203 + $0xc8] sm:$0xff] %v852
        %885 = vst [vmem:[%s203 + $0xd0] sm:$0xff] %v853
        %886 = vst [vmem:[%s203 + $0xd8] sm:$0xff] %v854
        %887 = vst [vmem:[%s203 + $0xe0] sm:$0xff] %v855
        %888 = vst [vmem:[%s203 + $0xe8] sm:$0xff] %v856
        %889 = vst [vmem:[%s203 + $0xf0] sm:$0xff] %v857
        %890 = vst [vmem:[%s203 + $0xf8] sm:$0xff] %v858
        %s891 = sand.u32 %s97, 1
        %s892 = scalar_lea.sflag [#allocation4], %s891
        %s893 = sand.u32 %s97, 1
        %s894 = smul.addr %s893, 256
        %s895 = scalar_lea.vmem [#allocation7], %s894
        // Predicated region
        $region41: #{tpu_custom_call.1} parent=31 // pred_check
          %p896 = pneg %p107
        $region42: #{tpu_custom_call.1} parent=31 // pred_check_branch
          %898 = sbr.rel (%p896) target = $region44
        $region43: #{tpu_custom_call.1} parent=31 // pred_region
          %s899 = smul.u32 32, %s21
          %s901 = ssub.s32 4096, 4096
          %902 = vsyncadd %s892, %s901
          %s903 = smul.addr %s899, 128
          %s904 = scalar_lea.hbm %s3, %s903
          %s905 = sshll.u32 %s895, 4
          %s906 = int_to_ptr.vmem [resolvable:$true] %s905
          %911 = dma.vmem_to_hbm [thread:$0]  %s906, 4096, %s904, %s892, 128, 128, 8
        $region44: #{tpu_custom_call.1} parent=31 // pred_fallthru
          _
      $region32: #{tpu_custom_call.1} parent=5 // pred_fallthru
        _
      %p912 = scmp.le.s32.totalorder 2, %s16
      // Predicated region
      $region45: #{tpu_custom_call.1} parent=5 // pred_check
        %p913 = pneg %p912
      $region46: #{tpu_custom_call.1} parent=5 // pred_check_branch
        %915 = sbr.rel (%p913) target = $region48
      $region47: #{tpu_custom_call.1} parent=5 // pred_region
        %s916 = ssub.s32 %s16, 2
        // Predicated region
        $region49: #{tpu_custom_call.1} parent=47 // pred_check
          %p917 = pneg %p113
        $region50: #{tpu_custom_call.1} parent=47 // pred_check_branch
          %919 = sbr.rel (%p917) target = $region52
        $region51: #{tpu_custom_call.1} parent=47 // pred_region
          %s920 = sand.u32 %s98, 1
          %s921 = scalar_lea.sflag [#allocation4], %s920
          %s922 = sand.u32 %s98, 1
          %s923 = smul.addr %s922, 256
          %s924 = scalar_lea.vmem [#allocation7], %s923
          %925 = dma.done %s921, 4096
        $region52: #{tpu_custom_call.1} parent=47 // pred_fallthru
          _
      $region48: #{tpu_custom_call.1} parent=5 // pred_fallthru
        _
    $region6: #{tpu_custom_call.1} parent=1 // loop_footer
      %s20 = sadd.s32 1, %s16
    $region7: #{tpu_custom_call.1} parent=1 // loop_footer_branch
      %15 = sbr.rel target = $region3
    $region8: #{tpu_custom_call.1} parent=1 // loop_exit
      _
    %926 = vsyncpa [#allocation3], 1
    %s927 = scalar_lea.sflag [#allocation3], 1
    %928 = vsyncpa %s927, 1
    %929 = vsyncpa [#allocation6], 1
    %930 = vsyncpa [#allocation4], 1
    %s931 = scalar_lea.sflag [#allocation4], 1
    %932 = vsyncpa %s931, 1

</llo_original>
